<compile_context>
chip_gen: v7x
topology: tpu7x:2x2x1
jax: 0.10.0
libtpu: 0.0.40
codegen_flags: <defaults>
</compile_context>

<pallas_src>
import numpy as np
import jax
import jax.numpy as jnp
from jax.experimental import pallas as pl
from jax.experimental.pallas import tpu as pltpu

# Lane-block cap (multiple of 128). Up to this batch size the grid is a single
# step; a (16 sublane x 32768 lane) f32 block is ~2 MiB per buffer, well under
# the default scoped VMEM on v5e/v6e/v7x.
_BT_MAX = 32768


# ----------------------------------------------------------------------------
# Deterministic buffer init (equivalent of unit_spherical_grid in mvtn/ops.py):
# Fibonacci / golden-spiral sampling of the unit sphere -> azimuth / elevation
# in degrees. (Host-side, runs once at module construction.)
# ----------------------------------------------------------------------------
def unit_spherical_grid(N):
    phi = np.pi * (3.0 - np.sqrt(5.0))  # golden angle
    pts = []
    for i in range(N):
        y = 1.0 - (i / float(N - 1)) * 2.0 if N > 1 else 0.0
        radius = np.sqrt(max(0.0, 1.0 - y * y))
        theta = phi * i
        x = np.cos(theta) * radius
        z = np.sin(theta) * radius
        pts.append((x, y, z))
    xyz = np.asarray(pts, dtype=np.float64)
    azim = np.degrees(np.arctan2(xyz[:, 1], xyz[:, 0]))
    elev = np.degrees(np.arcsin(np.clip(xyz[:, 2], -1.0, 1.0)))
    return azim.astype(np.float32), elev.astype(np.float32)


# ----------------------------------------------------------------------------
# Kernel 1: pure broadcast (transform_distance=False, forced through Pallas).
#   buf_ref : (3, V, 1)  fused [azim; elev; dist]  -> one input DMA
#   outputs : three (V, Bt) lane-dense blocks (batch on lanes) -> unmasked vst
# ----------------------------------------------------------------------------
def _views_broadcast_kernel(buf_ref, azim_ref, elev_ref, dist_ref):
    azim_ref[...] = jnp.broadcast_to(buf_ref[0], azim_ref.shape)  # lane broadcast
    elev_ref[...] = jnp.broadcast_to(buf_ref[1], elev_ref.shape)
    dist_ref[...] = jnp.broadcast_to(buf_ref[2], dist_ref.shape)


# ----------------------------------------------------------------------------
# Kernel 2: transform_distance=True path. Only the perturbed dist goes through
# Pallas (azim/elev are returned via plain broadcasts in the wrapper).
#   dist_ref  : (V, 1)   canonical distances (lane-broadcast inside)
#   noise_ref : (V, Bt)  uniform [0,1) noise, lane-dense
#   out_ref   : (V, Bt)  dist + dist*(u - 0.5)  ==  dist * (u + 0.5)
# ----------------------------------------------------------------------------
def _dist_perturb_kernel(dist_ref, noise_ref, out_ref):
    out_ref[...] = dist_ref[...] * (noise_ref[...] + 0.5)


class SphericalViewSelector:
    def __init__(self, nb_views=12, canonical_distance=2.2,
                 transform_distance=False, input_view_noise=0.0):
        self.nb_views = nb_views
        self.canonical_distance = canonical_distance
        self.transform_distance = transform_distance
        self.input_view_noise = input_view_noise
        self.training = False  # eval mode (matches nn.Module.eval())

        azim, elev = unit_spherical_grid(nb_views)
        dist = np.full((nb_views,), canonical_distance, dtype=np.float32)
        # Fused (3, V, 1) buffer: [azim; elev; dist] -> a single input DMA,
        # trailing singleton so in-kernel lane broadcasts need no reshape.
        self.views_buf = jnp.asarray(
            np.stack([azim, elev, dist], axis=0)[..., None], dtype=jnp.float32)

    # -------------------------- helpers -------------------------------------
    @staticmethod
    def _batch_tiling(B):
        if B <= _BT_MAX:
            return B, 1
        return _BT_MAX, pl.cdiv(B, _BT_MAX)

    def _pallas_broadcast(self, B):
        V = self.nb_views
        Bt, nsteps = self._batch_tiling(B)
        out_spec = pl.BlockSpec((V, Bt), lambda i: (0, i))
        azim_t, elev_t, dist_t = pl.pallas_call(
            _views_broadcast_kernel,
            grid=(nsteps,),
            in_specs=[pl.BlockSpec((3, V, 1), lambda i: (0, 0, 0))],
            out_specs=(out_spec, out_spec, out_spec),
            out_shape=tuple(jax.ShapeDtypeStruct((V, B), jnp.float32)
                            for _ in range(3)),
            compiler_params=pltpu.CompilerParams(
                dimension_semantics=("parallel",)),
        )(self.views_buf)
        # Lane-dense (V, B) -> user-facing (B, V).
        return azim_t.T, elev_t.T, dist_t.T

    def _pallas_perturbed_dist(self, noise_vb):
        V = self.nb_views
        B = noise_vb.shape[1]
        Bt, nsteps = self._batch_tiling(B)
        dist_t = pl.pallas_call(
            _dist_perturb_kernel,
            grid=(nsteps,),
            in_specs=[pl.BlockSpec((V, 1), lambda i: (0, 0)),
                      pl.BlockSpec((V, Bt), lambda i: (0, i))],
            out_specs=pl.BlockSpec((V, Bt), lambda i: (0, i)),
            out_shape=jax.ShapeDtypeStruct((V, B), jnp.float32),
            compiler_params=pltpu.CompilerParams(
                dimension_semantics=("parallel",)),
        )(self.views_buf[2], noise_vb)
        return dist_t.T

    # -------------------------- forward --------------------------------------
    def __call__(self, shape_features=None, c_batch_size=1, *,
                 seed=0, force_pallas=False):
        # shape_features is unused by the reference forward.
        B, V = int(c_batch_size), self.nb_views
        azim_row = self.views_buf[0, :, 0]
        elev_row = self.views_buf[1, :, 0]
        dist_row = self.views_buf[2, :, 0]

        # TODO(synk): training-time input_view_noise Gaussian path not
        # implemented (module default input_view_noise=0.0, eval mode).

        if self.transform_distance:
            # Lane-dense (V, B) uniform draw; same distribution as
            # torch.rand((B, V)) (not bit-identical to torch, by design).
            noise_vb = jax.random.uniform(jax.random.PRNGKey(seed), (V, B),
                                          dtype=jnp.float32)
            azim = jnp.broadcast_to(azim_row, (B, V))
            elev = jnp.broadcast_to(elev_row, (B, V))
            if force_pallas or B >= 4096:
                dist = self._pallas_perturbed_dist(noise_vb)
            else:
                # Tiny batch: pallas_call launch overhead exceeds total work;
                # XLA fuses this broadcast+FMA into one tiny elementwise op.
                dist = dist_row[None, :] * (noise_vb.T + 0.5)
            return azim, elev, dist

        if force_pallas:
            return self._pallas_broadcast(B)

        # Fast path: pure broadcasts, no pallas_call / DMA / launch overhead.
        return (jnp.broadcast_to(azim_row, (B, V)),
                jnp.broadcast_to(elev_row, (B, V)),
                jnp.broadcast_to(dist_row, (B, V)))


if __name__ == "__main__":
    key = jax.random.PRNGKey(0)
    nb_views = 12
    batch = 2

    # shape_features: unused by forward, constructed only for API fidelity.
    shape_features = jax.random.normal(key, (batch, 32), dtype=jnp.float32)

    # ---------------- default config: transform_distance=False --------------
    selector = SphericalViewSelector(nb_views=nb_views, canonical_distance=2.2,
                                     transform_distance=False,
                                     input_view_noise=0.0)
    buf = np.asarray(selector.views_buf)[:, :, 0]  # (3, V)
    ref_azim = np.broadcast_to(buf[0], (batch, nb_views))
    ref_elev = np.broadcast_to(buf[1], (batch, nb_views))
    ref_dist = np.broadcast_to(buf[2], (batch, nb_views))

    # (a) fast path (no pallas_call)
    azim, elev, dist = selector(shape_features, c_batch_size=batch)
    jax.block_until_ready((azim, elev, dist))
    np.testing.assert_allclose(np.asarray(azim), ref_azim, rtol=1e-6)
    np.testing.assert_allclose(np.asarray(elev), ref_elev, rtol=1e-6)
    np.testing.assert_allclose(np.asarray(dist), ref_dist, rtol=1e-6)

    # (b) same config forced through the lane-dense Pallas broadcast kernel
    azim_p, elev_p, dist_p = selector(shape_features, c_batch_size=batch,
                                      force_pallas=True)
    jax.block_until_ready((azim_p, elev_p, dist_p))
    assert azim_p.shape == (batch, nb_views) and azim_p.dtype == jnp.float32
    np.testing.assert_allclose(np.asarray(azim_p), ref_azim, rtol=1e-6)
    np.testing.assert_allclose(np.asarray(elev_p), ref_elev, rtol=1e-6)
    np.testing.assert_allclose(np.asarray(dist_p), ref_dist, rtol=1e-6)

    # (c) batch not a multiple of 8/128: padded-block writeback must be clean
    batch2 = 130
    azim_p2, elev_p2, dist_p2 = selector(None, c_batch_size=batch2,
                                         force_pallas=True)
    jax.block_until_ready((azim_p2, elev_p2, dist_p2))
    np.testing.assert_allclose(np.asarray(azim_p2),
                               np.broadcast_to(buf[0], (batch2, nb_views)),
                               rtol=1e-6)
    np.testing.assert_allclose(np.asarray(dist_p2),
                               np.broadcast_to(buf[2], (batch2, nb_views)),
                               rtol=1e-6)

    # ---------------- transform_distance=True: Pallas perturb kernel --------
    batch_r = 16
    selector_td = SphericalViewSelector(nb_views=nb_views, canonical_distance=2.2,
                                        transform_distance=True,
                                        input_view_noise=0.0)
    azim_r, elev_r, dist_r = selector_td(None, c_batch_size=batch_r, seed=123,
                                         force_pallas=True)
    jax.block_until_ready((azim_r, elev_r, dist_r))

    ref_azim_r = np.broadcast_to(buf[0], (batch_r, nb_views))
    ref_elev_r = np.broadcast_to(buf[1], (batch_r, nb_views))
    base_dist = np.broadcast_to(buf[2], (batch_r, nb_views))

    np.testing.assert_allclose(np.asarray(azim_r), ref_azim_r, rtol=1e-6)
    np.testing.assert_allclose(np.asarray(elev_r), ref_elev_r, rtol=1e-6)
    d = np.asarray(dist_r)
    # dist + dist*(u-0.5), u in [0,1)  =>  d in [0.5*dist, 1.5*dist)
    assert np.all(d >= 0.5 * base_dist - 1e-5) and np.all(d < 1.5 * base_dist + 1e-5)
    assert np.std(d) > 0.0  # randomness actually applied

    # exact match against the non-Pallas reference path (same seed/noise)
    _, _, dist_j = selector_td(None, c_batch_size=batch_r, seed=123,
                               force_pallas=False)
    jax.block_until_ready(dist_j)
    np.testing.assert_allclose(d, np.asarray(dist_j), rtol=1e-6)

    # determinism: same seed -> identical draw
    _, _, dist_r2 = selector_td(None, c_batch_size=batch_r, seed=123,
                                force_pallas=True)
    jax.block_until_ready(dist_r2)
    np.testing.assert_array_equal(np.asarray(dist_r2), d)

    print("KERNEL_OK")
</pallas_src>

<mosaic_0001>
module attributes {stable_mosaic.version = 11 : i64} {
  func.func @_views_broadcast_kernel(%arg0: i32, %arg1: memref<3x12x1xf32, #tpu.memory_space<vmem>>, %arg2: memref<12x2xf32, #tpu.memory_space<vmem>>, %arg3: memref<12x2xf32, #tpu.memory_space<vmem>>, %arg4: memref<12x2xf32, #tpu.memory_space<vmem>>) attributes {dimension_semantics = [#tpu.dimension_semantics<parallel>], iteration_bounds = array<i64: 1>, scalar_prefetch = 0 : i64, scratch_operands = 0 : i64, tpu.core_type = #tpu.core_type<tc>, window_params = [{pipeline_mode = #tpu.pipeline_mode<synchronous>, transform_indices = @transform_0, window_bounds = array<i64: 3, 12, 1>}, {transform_indices = @transform_1, window_bounds = array<i64: 12, 2>}, {transform_indices = @transform_2, window_bounds = array<i64: 12, 2>}, {transform_indices = @transform_3, window_bounds = array<i64: 12, 2>}]} {
    %c0 = arith.constant 0 : index
    %c0_0 = arith.constant 0 : index
    %c0_1 = arith.constant 0 : index
    %0 = vector.load %arg1[%c0, %c0_0, %c0_1] : memref<3x12x1xf32, #tpu.memory_space<vmem>>, vector<1x12x1xf32>
    %1 = vector.shape_cast %0 : vector<1x12x1xf32> to vector<12x1xf32>
    %2 = vector.shape_cast %1 : vector<12x1xf32> to vector<12x1xf32>
    %3 = vector.broadcast %2 : vector<12x1xf32> to vector<12x2xf32>
    %c0_2 = arith.constant 0 : index
    %c0_3 = arith.constant 0 : index
    %4 = vector.load %arg2[%c0_2, %c0_3] : memref<12x2xf32, #tpu.memory_space<vmem>>, vector<12x2xf32>
    tpu.vector_store %arg2[%c0_2, %c0_3], %3 {strides = array<i32>} : memref<12x2xf32, #tpu.memory_space<vmem>>, vector<12x2xf32>,
    %c1 = arith.constant 1 : index
    %c0_4 = arith.constant 0 : index
    %c0_5 = arith.constant 0 : index
    %5 = vector.load %arg1[%c1, %c0_4, %c0_5] : memref<3x12x1xf32, #tpu.memory_space<vmem>>, vector<1x12x1xf32>
    %6 = vector.shape_cast %5 : vector<1x12x1xf32> to vector<12x1xf32>
    %7 = vector.shape_cast %6 : vector<12x1xf32> to vector<12x1xf32>
    %8 = vector.broadcast %7 : vector<12x1xf32> to vector<12x2xf32>
    %c0_6 = arith.constant 0 : index
    %c0_7 = arith.constant 0 : index
    %9 = vector.load %arg3[%c0_6, %c0_7] : memref<12x2xf32, #tpu.memory_space<vmem>>, vector<12x2xf32>
    tpu.vector_store %arg3[%c0_6, %c0_7], %8 {strides = array<i32>} : memref<12x2xf32, #tpu.memory_space<vmem>>, vector<12x2xf32>,
    %c2 = arith.constant 2 : index
    %c0_8 = arith.constant 0 : index
    %c0_9 = arith.constant 0 : index
    %10 = vector.load %arg1[%c2, %c0_8, %c0_9] : memref<3x12x1xf32, #tpu.memory_space<vmem>>, vector<1x12x1xf32>
    %11 = vector.shape_cast %10 : vector<1x12x1xf32> to vector<12x1xf32>
    %12 = vector.shape_cast %11 : vector<12x1xf32> to vector<12x1xf32>
    %13 = vector.broadcast %12 : vector<12x1xf32> to vector<12x2xf32>
    %c0_10 = arith.constant 0 : index
    %c0_11 = arith.constant 0 : index
    %14 = vector.load %arg4[%c0_10, %c0_11] : memref<12x2xf32, #tpu.memory_space<vmem>>, vector<12x2xf32>
    tpu.vector_store %arg4[%c0_10, %c0_11], %13 {strides = array<i32>} : memref<12x2xf32, #tpu.memory_space<vmem>>, vector<12x2xf32>,
    return
  }
  func.func @transform_0(%arg0: i32) -> (i32, i32, i32) {
    %c0_i32 = arith.constant 0 : i32
    %c0_i32_0 = arith.constant 0 : i32
    %c0_i32_1 = arith.constant 0 : i32
    %c0_i32_2 = arith.constant 0 : i32
    return %c0_i32, %c0_i32_0, %c0_i32_1 : i32, i32, i32
  }
  func.func @transform_1(%arg0: i32) -> (i32, i32) {
    %c0_i32 = arith.constant 0 : i32
    %c0_i32_0 = arith.constant 0 : i32
    return %c0_i32, %arg0 : i32, i32
  }
  func.func @transform_2(%arg0: i32) -> (i32, i32) {
    %c0_i32 = arith.constant 0 : i32
    %c0_i32_0 = arith.constant 0 : i32
    return %c0_i32, %arg0 : i32, i32
  }
  func.func @transform_3(%arg0: i32) -> (i32, i32) {
    %c0_i32 = arith.constant 0 : i32
    %c0_i32_0 = arith.constant 0 : i32
    return %c0_i32, %arg0 : i32, i32
  }
}

</mosaic_0001>

<llo_original>
// kernel: tpu_custom_call.1
$region0: #{tpu_custom_call.1}
  #allocation0 [shape = 'u32[]', space=smem, size = 0x4, offset = 0x4, fixed_abs, tag = 'smem constant byte address 0x4 - core index']
  #allocation1 [shape = 'u32[144,128]{1,0:T(1,128)}', space=vmem, size = 0x12000, scoped, tag = 'internal scratch']
  %s0 = inlined_call_operand.vmem [shape: f32[3,12,1], index: 0, kind: input, shape index: {}]
  %s1 = inlined_call_operand.vmem [shape: f32[12,2], index: 1, kind: output, shape index: {0}]
  %s2 = inlined_call_operand.vmem [shape: f32[12,2], index: 2, kind: output, shape index: {1}]
  %s3 = inlined_call_operand.vmem [shape: f32[12,2], index: 3, kind: output, shape index: {2}]
  %4 = xla_tuple %s1, %s2, %s3
  %s5 = sld [smem:[#allocation0]]
  $region30: #{tpu_custom_call.1} parent=0
    _
  %s7 = ssub.s32 1, %s5
  %s8 = scalar_select 0, %s7, %s5
  // Predicated region
  $region2: #{tpu_custom_call.1} parent=0 // pred_check
    _
  $region3: #{tpu_custom_call.1} parent=0 // pred_check_branch
    %10 = sbr.rel (0) target = $region5
  $region4: #{tpu_custom_call.1} parent=0 // pred_region
    _
  $region5: #{tpu_custom_call.1} parent=0 // pred_fallthru
    _
  %v11 = vld [vmem:[%s0] sm:$0xff]
  %v12 = vld [vmem:[%s0 + $0x8] sm:$0xf]
  %14 = vset.pattern.permute.xlu0 0
  %15 = vperm.xlu0 %14, %v11
  %v16 = vpop.permute.xlu0 %15
  %19 = vset.pattern.permute.xlu0 0
  %20 = vperm.xlu0 %19, %v12
  %v21 = vpop.permute.xlu0 %20
  %vm23 = vcmask 15360
  %24 = vst.msk [vmem:[%s1] sm:$0xff] %vm23, %v16
  %vm25 = vcmask 11264
  %26 = vst.msk [vmem:[%s1 + $0x8] sm:$0xf] %vm25, %v21
  %s27 = scalar_lea.vmem %s0, 16
  %v28 = vld [vmem:[%s27] sm:$0xff]
  %v29 = vld [vmem:[%s27 + $0x8] sm:$0xf]
  %31 = vset.pattern.permute.xlu0 0
  %32 = vperm.xlu0 %31, %v28
  %v33 = vpop.permute.xlu0 %32
  %36 = vset.pattern.permute.xlu0 0
  %37 = vperm.xlu0 %36, %v29
  %v38 = vpop.permute.xlu0 %37
  %40 = vst.msk [vmem:[%s2] sm:$0xff] %vm23, %v33
  %41 = vst.msk [vmem:[%s2 + $0x8] sm:$0xf] %vm25, %v38
  %s42 = scalar_lea.vmem %s0, 32
  %v43 = vld [vmem:[%s42] sm:$0xff]
  %v44 = vld [vmem:[%s42 + $0x8] sm:$0xf]
  %46 = vset.pattern.permute.xlu0 0
  %47 = vperm.xlu0 %46, %v43
  %v48 = vpop.permute.xlu0 %47
  %51 = vset.pattern.permute.xlu0 0
  %52 = vperm.xlu0 %51, %v44
  %v53 = vpop.permute.xlu0 %52
  %55 = vst.msk [vmem:[%s3] sm:$0xff] %vm23, %v48
  %56 = vst.msk [vmem:[%s3 + $0x8] sm:$0xf] %vm25, %v53
  // Predicated region
  $region6: #{tpu_custom_call.1} parent=0 // pred_check
    _
  $region7: #{tpu_custom_call.1} parent=0 // pred_check_branch
    %58 = sbr.rel (0) target = $region9
  $region8: #{tpu_custom_call.1} parent=0 // pred_region
    _
  $region9: #{tpu_custom_call.1} parent=0 // pred_fallthru
    _
  // Predicated region
  $region10: #{tpu_custom_call.1} parent=0 // pred_check
    _
  $region11: #{tpu_custom_call.1} parent=0 // pred_check_branch
    %60 = sbr.rel (0) target = $region13
  $region12: #{tpu_custom_call.1} parent=0 // pred_region
    _
  $region13: #{tpu_custom_call.1} parent=0 // pred_fallthru
    _
  // Predicated region
  $region14: #{tpu_custom_call.1} parent=0 // pred_check
    _
  $region15: #{tpu_custom_call.1} parent=0 // pred_check_branch
    %62 = sbr.rel (0) target = $region17
  $region16: #{tpu_custom_call.1} parent=0 // pred_region
    _
  $region17: #{tpu_custom_call.1} parent=0 // pred_fallthru
    _
  // Predicated region
  $region18: #{tpu_custom_call.1} parent=0 // pred_check
    _
  $region19: #{tpu_custom_call.1} parent=0 // pred_check_branch
    %64 = sbr.rel (0) target = $region21
  $region20: #{tpu_custom_call.1} parent=0 // pred_region
    _
  $region21: #{tpu_custom_call.1} parent=0 // pred_fallthru
    _
  // Predicated region
  $region22: #{tpu_custom_call.1} parent=0 // pred_check
    _
  $region23: #{tpu_custom_call.1} parent=0 // pred_check_branch
    %66 = sbr.rel (0) target = $region25
  $region24: #{tpu_custom_call.1} parent=0 // pred_region
    _
  $region25: #{tpu_custom_call.1} parent=0 // pred_fallthru
    _
  // Predicated region
  $region26: #{tpu_custom_call.1} parent=0 // pred_check
    _
  $region27: #{tpu_custom_call.1} parent=0 // pred_check_branch
    %68 = sbr.rel (0) target = $region29
  $region28: #{tpu_custom_call.1} parent=0 // pred_region
    _
  $region29: #{tpu_custom_call.1} parent=0 // pred_fallthru
    _

</llo_original>
